<compile_context>
chip_gen: v7x
topology: tpu7x:2x2x1
jax: 0.10.0
libtpu: 0.0.40
codegen_flags: <defaults>
</compile_context>

<pallas_src>
import functools

import jax
import jax.numpy as jnp
from jax.experimental import pallas as pl
from jax.experimental.pallas import tpu as pltpu


def _round_up(n, m):
    return (n + m - 1) // m * m


def encoder_kernel(x_ref, y_ref,
                   w1_ref, b1_ref,
                   w2_ref, b2_ref,
                   w3_ref, b3_ref,
                   out_ref, *, z_dim):
    x = x_ref[...]
    y = y_ref[...]

    # xc = x.clone(); xc[x == -1] = y[x == -1]   (f32 compare/select on VPU)
    xc = jnp.where(x == -1.0, y, x)

    # hidden = relu(fc1(xc))  -- MXU operands in weight dtype, f32 accumulate
    h = jnp.dot(xc.astype(w1_ref.dtype), w1_ref[...],
                preferred_element_type=jnp.float32) + b1_ref[...]
    h = jnp.maximum(h, 0.0)

    # hidden = relu(fc2(hidden))
    h = jnp.dot(h.astype(w2_ref.dtype), w2_ref[...],
                preferred_element_type=jnp.float32) + b2_ref[...]
    h = jnp.maximum(h, 0.0)

    # fused head: [fc31 | fc32 | zero-pad]  -> single lane-dense matmul/store
    head = jnp.dot(h.astype(w3_ref.dtype), w3_ref[...],
                   preferred_element_type=jnp.float32) + b3_ref[...]

    # exp() (EUP) only on the z_scale half (cols >= z_dim); padded cols are
    # sliced away in the wrapper so exp(0)=1 there is harmless.
    col = jax.lax.broadcasted_iota(jnp.int32, head.shape, 1)
    out_ref[...] = jnp.where(col >= z_dim, jnp.exp(head), head)


def encoder_forward(x, y, params, *, weight_dtype=jnp.float32, block_m=256):
    """x, y: (B, 1, 28, 28) float32 (NCHW). Returns (z_loc, z_scale): (B, z_dim)."""
    B = x.shape[0]
    K = 784
    xf = x.reshape(B, K).astype(jnp.float32)
    yf = y.reshape(B, K).astype(jnp.float32)

    (w1, b1), (w2, b2), (w31, b31), (w32, b32) = params
    h1 = w1.shape[1]
    h2 = w2.shape[1]
    z_dim = w31.shape[1]

    # Fuse fc31/fc32 and pad the fused head to a lane-dense 128-multiple width.
    HEAD = 2 * z_dim
    HEAD_PAD = max(128, _round_up(HEAD, 128))
    w3 = jnp.pad(jnp.concatenate([w31, w32], axis=1),
                 ((0, 0), (0, HEAD_PAD - HEAD)))
    b3 = jnp.pad(jnp.concatenate([b31, b32], axis=1),
                 ((0, 0), (0, HEAD_PAD - HEAD))).astype(jnp.float32)

    # Cast weights for the MXU; keep biases f32 for the f32 accumulator add.
    w1c = w1.astype(weight_dtype)
    w2c = w2.astype(weight_dtype)
    w3c = w3.astype(weight_dtype)
    b1f = b1.astype(jnp.float32)
    b2f = b2.astype(jnp.float32)

    # Batch tiling (single tile at small B, "parallel" grid at large B).
    tm = min(block_m, _round_up(B, 8))
    Bp = _round_up(B, tm)
    if Bp != B:
        xf = jnp.pad(xf, ((0, Bp - B), (0, 0)))
        yf = jnp.pad(yf, ((0, Bp - B), (0, 0)))
    grid = (Bp // tm,)

    row_spec = lambda cols: pl.BlockSpec((tm, cols), lambda i: (i, 0))
    res_spec = lambda a: pl.BlockSpec(a.shape, lambda i: (0,) * a.ndim)

    wbytes = jnp.dtype(weight_dtype).itemsize
    cost = pl.CostEstimate(
        flops=2 * Bp * (K * h1 + h1 * h2 + h2 * HEAD_PAD),
        transcendentals=Bp * HEAD_PAD,
        bytes_accessed=(xf.size + yf.size) * 4
        + (w1c.size + w2c.size + w3c.size) * wbytes
        + (b1f.size + b2f.size + b3.size) * 4
        + Bp * HEAD_PAD * 4,
    )

    fused = pl.pallas_call(
        functools.partial(encoder_kernel, z_dim=z_dim),
        out_shape=jax.ShapeDtypeStruct((Bp, HEAD_PAD), jnp.float32),
        grid=grid,
        in_specs=[row_spec(K), row_spec(K),
                  res_spec(w1c), res_spec(b1f),
                  res_spec(w2c), res_spec(b2f),
                  res_spec(w3c), res_spec(b3)],
        out_specs=row_spec(HEAD_PAD),
        compiler_params=pltpu.CompilerParams(
            dimension_semantics=("parallel",)),
        cost_estimate=cost,
    )(xf, yf, w1c, b1f, w2c, b2f, w3c, b3)

    z_loc = fused[:B, :z_dim]
    z_scale = fused[:B, z_dim:2 * z_dim]
    return z_loc, z_scale


def init_params(key, z_dim, hidden_1, hidden_2):
    """Deterministic synthetic weights. Linear(i, o) stored as (W: (i, o), b: (1, o))."""
    ks = jax.random.split(key, 8)

    def linear(kw, kb, fan_in, fan_out):
        bound = 1.0 / jnp.sqrt(fan_in)
        w = jax.random.uniform(kw, (fan_in, fan_out), jnp.float32, -bound, bound)
        b = jax.random.uniform(kb, (1, fan_out), jnp.float32, -bound, bound)
        return w, b

    return (
        linear(ks[0], ks[1], 784, hidden_1),
        linear(ks[2], ks[3], hidden_1, hidden_2),
        linear(ks[4], ks[5], hidden_2, z_dim),
        linear(ks[6], ks[7], hidden_2, z_dim),
    )


def encoder_reference(x, y, params):
    """Pure-JAX reference matching the PyTorch forward."""
    B = x.shape[0]
    xc = jnp.where(x == -1.0, y, x).reshape(B, 784)
    (w1, b1), (w2, b2), (w31, b31), (w32, b32) = params
    h = jnp.maximum(xc @ w1 + b1, 0.0)
    h = jnp.maximum(h @ w2 + b2, 0.0)
    return h @ w31 + b31, jnp.exp(h @ w32 + b32)


def _make_inputs(kx, ky, km, B):
    x = jax.random.uniform(kx, (B, 1, 28, 28), jnp.float32)
    y = jax.random.uniform(ky, (B, 1, 28, 28), jnp.float32)
    mask = jax.random.bernoulli(km, 0.3, (B, 1, 28, 28))
    return jnp.where(mask, -1.0, x), y


if __name__ == "__main__":
    key = jax.random.PRNGKey(0)
    k_x, k_y, k_m, k_p = jax.random.split(key, 4)

    z_dim, hidden_1, hidden_2 = 32, 256, 128
    params = init_params(k_p, z_dim, hidden_1, hidden_2)

    # --- small batch, f32 weights: tight check vs. reference ---
    x8, y8 = _make_inputs(k_x, k_y, k_m, 8)
    z_loc, z_scale = encoder_forward(x8, y8, params, weight_dtype=jnp.float32)
    jax.block_until_ready((z_loc, z_scale))
    ref_loc, ref_scale = encoder_reference(x8, y8, params)
    assert z_loc.shape == (8, z_dim) and z_scale.shape == (8, z_dim)
    assert jnp.allclose(z_loc, ref_loc, atol=1e-4, rtol=1e-4)
    assert jnp.allclose(z_scale, ref_scale, atol=1e-4, rtol=1e-4)

    # --- bf16 weights (v6e/v7x MXU path, f32 elementwise): looser check ---
    loc_bf, scale_bf = encoder_forward(x8, y8, params, weight_dtype=jnp.bfloat16)
    jax.block_until_ready((loc_bf, scale_bf))
    assert jnp.allclose(loc_bf, ref_loc, atol=5e-2, rtol=5e-2)
    assert jnp.allclose(scale_bf, ref_scale, atol=5e-2, rtol=5e-2)

    # --- multi-tile batch-parallel grid (3 tiles of 8 rows) ---
    x24, y24 = _make_inputs(k_x, k_y, k_m, 24)
    loc24, scale24 = encoder_forward(x24, y24, params,
                                     weight_dtype=jnp.float32, block_m=8)
    jax.block_until_ready((loc24, scale24))
    ref24_loc, ref24_scale = encoder_reference(x24, y24, params)
    assert jnp.allclose(loc24, ref24_loc, atol=1e-4, rtol=1e-4)
    assert jnp.allclose(scale24, ref24_scale, atol=1e-4, rtol=1e-4)

    print("KERNEL_OK")
</pallas_src>

<mosaic_0001>
module attributes {stable_mosaic.version = 11 : i64} {
  func.func @encoder_kernel(%arg0: i32, %arg1: memref<8x784xf32, #tpu.memory_space<vmem>>, %arg2: memref<8x784xf32, #tpu.memory_space<vmem>>, %arg3: memref<784x256xf32, #tpu.memory_space<vmem>>, %arg4: memref<1x256xf32, #tpu.memory_space<vmem>>, %arg5: memref<256x128xf32, #tpu.memory_space<vmem>>, %arg6: memref<1x128xf32, #tpu.memory_space<vmem>>, %arg7: memref<128x128xf32, #tpu.memory_space<vmem>>, %arg8: memref<1x128xf32, #tpu.memory_space<vmem>>, %arg9: memref<8x128xf32, #tpu.memory_space<vmem>>) attributes {dimension_semantics = [#tpu.dimension_semantics<parallel>], iteration_bounds = array<i64: 1>, scalar_prefetch = 0 : i64, scratch_operands = 0 : i64, tpu.core_type = #tpu.core_type<tc>, window_params = [{transform_indices = @transform_0, window_bounds = array<i64: 8, 784>}, {transform_indices = @transform_1, window_bounds = array<i64: 8, 784>}, {pipeline_mode = #tpu.pipeline_mode<synchronous>, transform_indices = @transform_2, window_bounds = array<i64: 784, 256>}, {pipeline_mode = #tpu.pipeline_mode<synchronous>, transform_indices = @transform_3, window_bounds = array<i64: 1, 256>}, {pipeline_mode = #tpu.pipeline_mode<synchronous>, transform_indices = @transform_4, window_bounds = array<i64: 256, 128>}, {pipeline_mode = #tpu.pipeline_mode<synchronous>, transform_indices = @transform_5, window_bounds = array<i64: 1, 128>}, {pipeline_mode = #tpu.pipeline_mode<synchronous>, transform_indices = @transform_6, window_bounds = array<i64: 128, 128>}, {pipeline_mode = #tpu.pipeline_mode<synchronous>, transform_indices = @transform_7, window_bounds = array<i64: 1, 128>}, {transform_indices = @transform_8, window_bounds = array<i64: 8, 128>}]} {
    %c0 = arith.constant 0 : index
    %c0_0 = arith.constant 0 : index
    %0 = vector.load %arg1[%c0, %c0_0] : memref<8x784xf32, #tpu.memory_space<vmem>>, vector<8x784xf32>
    %c0_1 = arith.constant 0 : index
    %c0_2 = arith.constant 0 : index
    %1 = vector.load %arg2[%c0_1, %c0_2] : memref<8x784xf32, #tpu.memory_space<vmem>>, vector<8x784xf32>
    %cst = arith.constant -1.000000e+00 : f32
    %2 = vector.broadcast %cst : f32 to vector<8x784xf32>
    %3 = arith.cmpf oeq, %0, %2 : vector<8x784xf32>
    %4 = arith.select %3, %1, %0 : vector<8x784xi1>, vector<8x784xf32>
    %c0_3 = arith.constant 0 : index
    %c0_4 = arith.constant 0 : index
    %5 = vector.load %arg3[%c0_3, %c0_4] : memref<784x256xf32, #tpu.memory_space<vmem>>, vector<784x256xf32>
    %cst_5 = arith.constant dense<0.000000e+00> : vector<8x256xf32>
    %6 = tpu.matmul %4, %5, %cst_5 {dimension_numbers = #tpu.dot_dimension_numbers<[1], [0], [0], [1], [0, 0, 1, 1], [], []>} : vector<8x784xf32>, vector<784x256xf32>, vector<8x256xf32> -> vector<8x256xf32>
    %c0_6 = arith.constant 0 : index
    %c0_7 = arith.constant 0 : index
    %7 = vector.load %arg4[%c0_6, %c0_7] : memref<1x256xf32, #tpu.memory_space<vmem>>, vector<1x256xf32>
    %8 = vector.broadcast %7 : vector<1x256xf32> to vector<8x256xf32>
    %9 = arith.addf %6, %8 : vector<8x256xf32>
    %cst_8 = arith.constant 0.000000e+00 : f32
    %10 = vector.broadcast %cst_8 : f32 to vector<8x256xf32>
    %11 = arith.maximumf %9, %10 : vector<8x256xf32>
    %c0_9 = arith.constant 0 : index
    %c0_10 = arith.constant 0 : index
    %12 = vector.load %arg5[%c0_9, %c0_10] : memref<256x128xf32, #tpu.memory_space<vmem>>, vector<256x128xf32>
    %cst_11 = arith.constant dense<0.000000e+00> : vector<8x128xf32>
    %13 = tpu.matmul %11, %12, %cst_11 {dimension_numbers = #tpu.dot_dimension_numbers<[1], [0], [0], [1], [0, 0, 1, 1], [], []>} : vector<8x256xf32>, vector<256x128xf32>, vector<8x128xf32> -> vector<8x128xf32>
    %c0_12 = arith.constant 0 : index
    %c0_13 = arith.constant 0 : index
    %14 = vector.load %arg6[%c0_12, %c0_13] : memref<1x128xf32, #tpu.memory_space<vmem>>, vector<1x128xf32>
    %15 = vector.broadcast %14 : vector<1x128xf32> to vector<8x128xf32>
    %16 = arith.addf %13, %15 : vector<8x128xf32>
    %cst_14 = arith.constant 0.000000e+00 : f32
    %17 = vector.broadcast %cst_14 : f32 to vector<8x128xf32>
    %18 = arith.maximumf %16, %17 : vector<8x128xf32>
    %c0_15 = arith.constant 0 : index
    %c0_16 = arith.constant 0 : index
    %19 = vector.load %arg7[%c0_15, %c0_16] : memref<128x128xf32, #tpu.memory_space<vmem>>, vector<128x128xf32>
    %cst_17 = arith.constant dense<0.000000e+00> : vector<8x128xf32>
    %20 = tpu.matmul %18, %19, %cst_17 {dimension_numbers = #tpu.dot_dimension_numbers<[1], [0], [0], [1], [0, 0, 1, 1], [], []>} : vector<8x128xf32>, vector<128x128xf32>, vector<8x128xf32> -> vector<8x128xf32>
    %c0_18 = arith.constant 0 : index
    %c0_19 = arith.constant 0 : index
    %21 = vector.load %arg8[%c0_18, %c0_19] : memref<1x128xf32, #tpu.memory_space<vmem>>, vector<1x128xf32>
    %22 = vector.broadcast %21 : vector<1x128xf32> to vector<8x128xf32>
    %23 = arith.addf %20, %22 : vector<8x128xf32>
    %24 = tpu.iota {dimensions = array<i32: 1>} : vector<8x128xi32>
    %c32_i32 = arith.constant 32 : i32
    %25 = vector.broadcast %c32_i32 : i32 to vector<8x128xi32>
    %26 = arith.cmpi sge, %24, %25 : vector<8x128xi32>
    %27 = math.exp %23 : vector<8x128xf32>
    %28 = arith.select %26, %27, %23 : vector<8x128xi1>, vector<8x128xf32>
    %c0_20 = arith.constant 0 : index
    %c0_21 = arith.constant 0 : index
    %29 = vector.load %arg9[%c0_20, %c0_21] : memref<8x128xf32, #tpu.memory_space<vmem>>, vector<8x128xf32>
    tpu.vector_store %arg9[%c0_20, %c0_21], %28 {strides = array<i32>} : memref<8x128xf32, #tpu.memory_space<vmem>>, vector<8x128xf32>,
    return
  }
  func.func @transform_0(%arg0: i32) -> (i32, i32) {
    %c0_i32 = arith.constant 0 : i32
    %c0_i32_0 = arith.constant 0 : i32
    return %arg0, %c0_i32 : i32, i32
  }
  func.func @transform_1(%arg0: i32) -> (i32, i32) {
    %c0_i32 = arith.constant 0 : i32
    %c0_i32_0 = arith.constant 0 : i32
    return %arg0, %c0_i32 : i32, i32
  }
  func.func @transform_2(%arg0: i32) -> (i32, i32) {
    %c0_i32 = arith.constant 0 : i32
    %c0_i32_0 = arith.constant 0 : i32
    %c0_i32_1 = arith.constant 0 : i32
    return %c0_i32, %c0_i32_0 : i32, i32
  }
  func.func @transform_3(%arg0: i32) -> (i32, i32) {
    %c0_i32 = arith.constant 0 : i32
    %c0_i32_0 = arith.constant 0 : i32
    %c0_i32_1 = arith.constant 0 : i32
    return %c0_i32, %c0_i32_0 : i32, i32
  }
  func.func @transform_4(%arg0: i32) -> (i32, i32) {
    %c0_i32 = arith.constant 0 : i32
    %c0_i32_0 = arith.constant 0 : i32
    %c0_i32_1 = arith.constant 0 : i32
    return %c0_i32, %c0_i32_0 : i32, i32
  }
  func.func @transform_5(%arg0: i32) -> (i32, i32) {
    %c0_i32 = arith.constant 0 : i32
    %c0_i32_0 = arith.constant 0 : i32
    %c0_i32_1 = arith.constant 0 : i32
    return %c0_i32, %c0_i32_0 : i32, i32
  }
  func.func @transform_6(%arg0: i32) -> (i32, i32) {
    %c0_i32 = arith.constant 0 : i32
    %c0_i32_0 = arith.constant 0 : i32
    %c0_i32_1 = arith.constant 0 : i32
    return %c0_i32, %c0_i32_0 : i32, i32
  }
  func.func @transform_7(%arg0: i32) -> (i32, i32) {
    %c0_i32 = arith.constant 0 : i32
    %c0_i32_0 = arith.constant 0 : i32
    %c0_i32_1 = arith.constant 0 : i32
    return %c0_i32, %c0_i32_0 : i32, i32
  }
  func.func @transform_8(%arg0: i32) -> (i32, i32) {
    %c0_i32 = arith.constant 0 : i32
    %c0_i32_0 = arith.constant 0 : i32
    return %arg0, %c0_i32 : i32, i32
  }
}

</mosaic_0001>

<llo_original>
// kernel: tpu_custom_call.1
$region0: #{tpu_custom_call.1}
  #allocation0 [shape = 'u32[]', space=smem, size = 0x4, offset = 0x4, fixed_abs, tag = 'smem constant byte address 0x4 - core index']
  #allocation1 [shape = 'u32[144,128]{1,0:T(1,128)}', space=vmem, size = 0x12000, scoped, tag = 'internal scratch']
  %s0 = inlined_call_operand.hbm [shape: f32[8,784], index: 0, kind: input, shape index: {}]
  %s1 = inlined_call_operand.hbm [shape: f32[8,784], index: 1, kind: input, shape index: {}]
  %s2 = inlined_call_operand.hbm [shape: f32[784,256], index: 2, kind: input, shape index: {}]
  %s3 = inlined_call_operand.vmem [shape: f32[1,256], index: 3, kind: input, shape index: {}]
  %s4 = inlined_call_operand.hbm [shape: f32[256,128], index: 4, kind: input, shape index: {}]
  %s5 = inlined_call_operand.vmem [shape: f32[1,128], index: 5, kind: input, shape index: {}]
  %s6 = inlined_call_operand.hbm [shape: f32[128,128], index: 6, kind: input, shape index: {}]
  %s7 = inlined_call_operand.vmem [shape: f32[1,128], index: 7, kind: input, shape index: {}]
  %s8 = inlined_call_operand.hbm [shape: f32[8,128], index: 8, kind: output, shape index: {}]
  %s9 = sld [smem:[#allocation0]]
  $region62: #{tpu_custom_call.1} parent=0
    _
  %s11 = ssub.s32 1, %s9
  %s12 = scalar_select 0, %s11, %s9
  $region1: #{tpu_custom_call.1} parent=0
    #allocation2 [shape = 'u8[28672]{0}', space=vmem, size = 0x7000, scoped, tag = 'input window, operand 0, single buffered']
    #allocation3 [shape = 's32[1]{0}', space=sflag, size = 0x4, scoped, tag = 'scoped memory for tpu_custom_call.1']
    #allocation4 [shape = 's32[1]{0}', space=sflag, size = 0x4, scoped, tag = 'scoped memory for tpu_custom_call.1']
    #allocation5 [shape = 'u8[28672]{0}', space=vmem, size = 0x7000, scoped, tag = 'input window, operand 1, single buffered']
    #allocation6 [shape = 's32[1]{0}', space=sflag, size = 0x4, scoped, tag = 'scoped memory for tpu_custom_call.1']
    #allocation7 [shape = 'u8[802816]{0}', space=vmem, size = 0xc4000, scoped, tag = 'input window, operand 2, single buffered']
    #allocation8 [shape = 'u8[131072]{0}', space=vmem, size = 0x20000, scoped, tag = 'input window, operand 4, single buffered']
    #allocation9 [shape = 's32[1]{0}', space=sflag, size = 0x4, scoped, tag = 'scoped memory for tpu_custom_call.1']
    #allocation10 [shape = 'u8[65536]{0}', space=vmem, size = 0x10000, scoped, tag = 'input window, operand 6, single buffered']
    #allocation11 [shape = 'u8[4096]{0}', space=vmem, size = 0x1000, scoped, tag = 'output window, operand 0, single buffered']
    %13 = vsyncpa [#allocation3], 0
    %14 = vsyncpa [#allocation6], 0
    %15 = vsyncpa [#allocation9], 0
    %16 = vsyncpa [#allocation4], 0
    // Predicated region
    $region2: #{tpu_custom_call.1} parent=1 // pred_check
      _
    $region3: #{tpu_custom_call.1} parent=1 // pred_check_branch
      %18 = sbr.rel (0) target = $region5
    $region4: #{tpu_custom_call.1} parent=1 // pred_region
      %s20 = ssub.s32 896, 896
      %21 = vsyncadd [#allocation3], %s20
      %s23 = sshll.u32 [#allocation2], 4
      %s24 = int_to_ptr.vmem [resolvable:$true] %s23
      %26 = dma.hbm_to_vmem [thread:$0]  %s0, 896, %s24, [#allocation3]
    $region5: #{tpu_custom_call.1} parent=1 // pred_fallthru
      _
    // Predicated region
    $region6: #{tpu_custom_call.1} parent=1 // pred_check
      _
    $region7: #{tpu_custom_call.1} parent=1 // pred_check_branch
      %28 = sbr.rel (0) target = $region9
    $region8: #{tpu_custom_call.1} parent=1 // pred_region
      %s30 = ssub.s32 896, 896
      %31 = vsyncadd [#allocation6], %s30
      %s33 = sshll.u32 [#allocation5], 4
      %s34 = int_to_ptr.vmem [resolvable:$true] %s33
      %36 = dma.hbm_to_vmem [thread:$0]  %s1, 896, %s34, [#allocation6]
    $region9: #{tpu_custom_call.1} parent=1 // pred_fallthru
      _
    // Predicated region
    $region10: #{tpu_custom_call.1} parent=1 // pred_check
      _
    $region11: #{tpu_custom_call.1} parent=1 // pred_check_branch
      %38 = sbr.rel (0) target = $region13
    $region12: #{tpu_custom_call.1} parent=1 // pred_region
      %s40 = ssub.s32 25088, 25088
      %41 = vsyncadd [#allocation6], %s40
      %s42 = sshll.u32 [#allocation7], 4
      %s43 = int_to_ptr.vmem [resolvable:$true] %s42
      %48 = dma.hbm_to_vmem [thread:$0]  %s2, 25088, %s43, [#allocation6], 256, 256, 16
    $region13: #{tpu_custom_call.1} parent=1 // pred_fallthru
      _
    // Predicated region
    $region14: #{tpu_custom_call.1} parent=1 // pred_check
      _
    $region15: #{tpu_custom_call.1} parent=1 // pred_check_branch
      %50 = sbr.rel (0) target = $region17
    $region16: #{tpu_custom_call.1} parent=1 // pred_region
      _
    $region17: #{tpu_custom_call.1} parent=1 // pred_fallthru
      _
    // Predicated region
    $region18: #{tpu_custom_call.1} parent=1 // pred_check
      _
    $region19: #{tpu_custom_call.1} parent=1 // pred_check_branch
      %52 = sbr.rel (0) target = $region21
    $region20: #{tpu_custom_call.1} parent=1 // pred_region
      %s54 = ssub.s32 4096, 4096
      %55 = vsyncadd [#allocation9], %s54
      %s56 = sshll.u32 [#allocation8], 4
      %s57 = int_to_ptr.vmem [resolvable:$true] %s56
      %62 = dma.hbm_to_vmem [thread:$0]  %s4, 4096, %s57, [#allocation9], 128, 128, 8
    $region21: #{tpu_custom_call.1} parent=1 // pred_fallthru
      _
    // Predicated region
    $region22: #{tpu_custom_call.1} parent=1 // pred_check
      _
    $region23: #{tpu_custom_call.1} parent=1 // pred_check_branch
      %64 = sbr.rel (0) target = $region25
    $region24: #{tpu_custom_call.1} parent=1 // pred_region
      _
    $region25: #{tpu_custom_call.1} parent=1 // pred_fallthru
      _
    // Predicated region
    $region26: #{tpu_custom_call.1} parent=1 // pred_check
      _
    $region27: #{tpu_custom_call.1} parent=1 // pred_check_branch
      %66 = sbr.rel (0) target = $region29
    $region28: #{tpu_custom_call.1} parent=1 // pred_region
      %s68 = ssub.s32 2048, 2048
      %69 = vsyncadd [#allocation9], %s68
      %s70 = sshll.u32 [#allocation10], 4
      %s71 = int_to_ptr.vmem [resolvable:$true] %s70
      %76 = dma.hbm_to_vmem [thread:$0]  %s6, 2048, %s71, [#allocation9], 128, 128, 8
    $region29: #{tpu_custom_call.1} parent=1 // pred_fallthru
      _
    // Predicated region
    $region30: #{tpu_custom_call.1} parent=1 // pred_check
      _
    $region31: #{tpu_custom_call.1} parent=1 // pred_check_branch
      %78 = sbr.rel (0) target = $region33
    $region32: #{tpu_custom_call.1} parent=1 // pred_region
      _
    $region33: #{tpu_custom_call.1} parent=1 // pred_fallthru
      _
    // Predicated region
    $region34: #{tpu_custom_call.1} parent=1 // pred_check
      _
    $region35: #{tpu_custom_call.1} parent=1 // pred_check_branch
      %80 = sbr.rel (0) target = $region37
    $region36: #{tpu_custom_call.1} parent=1 // pred_region
      %81 = dma.done [#allocation3], 896
    $region37: #{tpu_custom_call.1} parent=1 // pred_fallthru
      _
    // Predicated region
    $region38: #{tpu_custom_call.1} parent=1 // pred_check
      _
    $region39: #{tpu_custom_call.1} parent=1 // pred_check_branch
      %83 = sbr.rel (0) target = $region41
    $region40: #{tpu_custom_call.1} parent=1 // pred_region
      %84 = dma.done [#allocation6], 896
    $region41: #{tpu_custom_call.1} parent=1 // pred_fallthru
      _
    // Predicated region
    $region42: #{tpu_custom_call.1} parent=1 // pred_check
      _
    $region43: #{tpu_custom_call.1} parent=1 // pred_check_branch
      %86 = sbr.rel (0) target = $region45
    $region44: #{tpu_custom_call.1} parent=1 // pred_region
      %87 = dma.done [#allocation6], 25088
    $region45: #{tpu_custom_call.1} parent=1 // pred_fallthru
      _
    // Predicated region
    $region46: #{tpu_custom_call.1} parent=1 // pred_check
      _
    $region47: #{tpu_custom_call.1} parent=1 // pred_check_branch
      %89 = sbr.rel (0) target = $region49
    $region48: #{tpu_custom_call.1} parent=1 // pred_region
      %90 = dma.done [#allocation9], 4096
    $region49: #{tpu_custom_call.1} parent=1 // pred_fallthru
      _
    // Predicated region
    $region50: #{tpu_custom_call.1} parent=1 // pred_check
      _
    $region51: #{tpu_custom_call.1} parent=1 // pred_check_branch
      %92 = sbr.rel (0) target = $region53
    $region52: #{tpu_custom_call.1} parent=1 // pred_region
      %93 = dma.done [#allocation9], 2048
    $region53: #{tpu_custom_call.1} parent=1 // pred_fallthru
      _
    %v94 = vld [vmem:[#allocation2] sm:$0xff]
    %v95 = vld [vmem:[#allocation2 + $0x8] sm:$0xff]
    %v96 = vld [vmem:[#allocation2 + $0x10] sm:$0xff]
    %v97 = vld [vmem:[#allocation2 + $0x18] sm:$0xff]
    %v98 = vld [vmem:[#allocation2 + $0x20] sm:$0xff]
    %v99 = vld [vmem:[#allocation2 + $0x28] sm:$0xff]
    %v100 = vld [vmem:[#allocation2 + $0x30] sm:$0xff]
    %v101 = vld [vmem:[#allocation5] sm:$0xff]
    %v102 = vld [vmem:[#allocation5 + $0x8] sm:$0xff]
    %v103 = vld [vmem:[#allocation5 + $0x10] sm:$0xff]
    %v104 = vld [vmem:[#allocation5 + $0x18] sm:$0xff]
    %v105 = vld [vmem:[#allocation5 + $0x20] sm:$0xff]
    %v106 = vld [vmem:[#allocation5 + $0x28] sm:$0xff]
    %v107 = vld [vmem:[#allocation5 + $0x30] sm:$0xff]
    %vm108 = vcmp.eq.f32.partialorder %v94, -1.0
    %vm109 = vcmp.eq.f32.partialorder %v95, -1.0
    %vm110 = vcmp.eq.f32.partialorder %v96, -1.0
    %vm111 = vcmp.eq.f32.partialorder %v97, -1.0
    %vm112 = vcmp.eq.f32.partialorder %v98, -1.0
    %vm113 = vcmp.eq.f32.partialorder %v99, -1.0
    %vm114 = vcmp.eq.f32.partialorder %v100, -1.0
    %v115 = vsel %vm108, %v101, %v94
    %v116 = vsel %vm109, %v102, %v95
    %v117 = vsel %vm110, %v103, %v96
    %v118 = vsel %vm111, %v104, %v97
    %v119 = vsel %vm112, %v105, %v98
    %v120 = vsel %vm113, %v106, %v99
    %v121 = vsel %vm114, %v107, %v100
    %v122 = vld [vmem:[#allocation7] sm:$0xff]
    %v123 = vld [vmem:[#allocation7 + $0x8] sm:$0xff]
    %v124 = vld [vmem:[#allocation7 + $0x10] sm:$0xff]
    %v125 = vld [vmem:[#allocation7 + $0x18] sm:$0xff]
    %v126 = vld [vmem:[#allocation7 + $0x20] sm:$0xff]
    %v127 = vld [vmem:[#allocation7 + $0x28] sm:$0xff]
    %v128 = vld [vmem:[#allocation7 + $0x30] sm:$0xff]
    %v129 = vld [vmem:[#allocation7 + $0x38] sm:$0xff]
    %v130 = vld [vmem:[#allocation7 + $0x40] sm:$0xff]
    %v131 = vld [vmem:[#allocation7 + $0x48] sm:$0xff]
    %v132 = vld [vmem:[#allocation7 + $0x50] sm:$0xff]
    %v133 = vld [vmem:[#allocation7 + $0x58] sm:$0xff]
    %v134 = vld [vmem:[#allocation7 + $0x60] sm:$0xff]
    %v135 = vld [vmem:[#allocation7 + $0x68] sm:$0xff]
    %v136 = vld [vmem:[#allocation7 + $0x70] sm:$0xff]
    %v137 = vld [vmem:[#allocation7 + $0x78] sm:$0xff]
    %v138 = vld [vmem:[#allocation7 + $0x80] sm:$0xff]
    %v139 = vld [vmem:[#allocation7 + $0x88] sm:$0xff]
    %v140 = vld [vmem:[#allocation7 + $0x90] sm:$0xff]
    %v141 = vld [vmem:[#allocation7 + $0x98] sm:$0xff]
    %v142 = vld [vmem:[#allocation7 + $0xa0] sm:$0xff]
    %v143 = vld [vmem:[#allocation7 + $0xa8] sm:$0xff]
    %v144 = vld [vmem:[#allocation7 + $0xb0] sm:$0xff]
    %v145 = vld [vmem:[#allocation7 + $0xb8] sm:$0xff]
    %v146 = vld [vmem:[#allocation7 + $0xc0] sm:$0xff]
    %v147 = vld [vmem:[#allocation7 + $0xc8] sm:$0xff]
    %v148 = vld [vmem:[#allocation7 + $0xd0] sm:$0xff]
    %v149 = vld [vmem:[#allocation7 + $0xd8] sm:$0xff]
    %v150 = vld [vmem:[#allocation7 + $0xe0] sm:$0xff]
    %v151 = vld [vmem:[#allocation7 + $0xe8] sm:$0xff]
    %v152 = vld [vmem:[#allocation7 + $0xf0] sm:$0xff]
    %v153 = vld [vmem:[#allocation7 + $0xf8] sm:$0xff]
    %v154 = vld [vmem:[#allocation7 + $0x100] sm:$0xff]
    %v155 = vld [vmem:[#allocation7 + $0x108] sm:$0xff]
    %v156 = vld [vmem:[#allocation7 + $0x110] sm:$0xff]
    %v157 = vld [vmem:[#allocation7 + $0x118] sm:$0xff]
    %v158 = vld [vmem:[#allocation7 + $0x120] sm:$0xff]
    %v159 = vld [vmem:[#allocation7 + $0x128] sm:$0xff]
    %v160 = vld [vmem:[#allocation7 + $0x130] sm:$0xff]
    %v161 = vld [vmem:[#allocation7 + $0x138] sm:$0xff]
    %v162 = vld [vmem:[#allocation7 + $0x140] sm:$0xff]
    %v163 = vld [vmem:[#allocation7 + $0x148] sm:$0xff]
    %v164 = vld [vmem:[#allocation7 + $0x150] sm:$0xff]
    %v165 = vld [vmem:[#allocation7 + $0x158] sm:$0xff]
    %v166 = vld [vmem:[#allocation7 + $0x160] sm:$0xff]
    %v167 = vld [vmem:[#allocation7 + $0x168] sm:$0xff]
    %v168 = vld [vmem:[#allocation7 + $0x170] sm:$0xff]
    %v169 = vld [vmem:[#allocation7 + $0x178] sm:$0xff]
    %v170 = vld [vmem:[#allocation7 + $0x180] sm:$0xff]
    %v171 = vld [vmem:[#allocation7 + $0x188] sm:$0xff]
    %v172 = vld [vmem:[#allocation7 + $0x190] sm:$0xff]
    %v173 = vld [vmem:[#allocation7 + $0x198] sm:$0xff]
    %v174 = vld [vmem:[#allocation7 + $0x1a0] sm:$0xff]
    %v175 = vld [vmem:[#allocation7 + $0x1a8] sm:$0xff]
    %v176 = vld [vmem:[#allocation7 + $0x1b0] sm:$0xff]
    %v177 = vld [vmem:[#allocation7 + $0x1b8] sm:$0xff]
    %v178 = vld [vmem:[#allocation7 + $0x1c0] sm:$0xff]
    %v179 = vld [vmem:[#allocation7 + $0x1c8] sm:$0xff]
    %v180 = vld [vmem:[#allocation7 + $0x1d0] sm:$0xff]
    %v181 = vld [vmem:[#allocation7 + $0x1d8] sm:$0xff]
    %v182 = vld [vmem:[#allocation7 + $0x1e0] sm:$0xff]
    %v183 = vld [vmem:[#allocation7 + $0x1e8] sm:$0xff]
    %v184 = vld [vmem:[#allocation7 + $0x1f0] sm:$0xff]
    %v185 = vld [vmem:[#allocation7 + $0x1f8] sm:$0xff]
    %v186 = vld [vmem:[#allocation7 + $0x200] sm:$0xff]
    %v187 = vld [vmem:[#allocation7 + $0x208] sm:$0xff]
    %v188 = vld [vmem:[#allocation7 + $0x210] sm:$0xff]
    %v189 = vld [vmem:[#allocation7 + $0x218] sm:$0xff]
    %v190 = vld [vmem:[#allocation7 + $0x220] sm:$0xff]
    %v191 = vld [vmem:[#allocation7 + $0x228] sm:$0xff]
    %v192 = vld [vmem:[#allocation7 + $0x230] sm:$0xff]
    %v193 = vld [vmem:[#allocation7 + $0x238] sm:$0xff]
    %v194 = vld [vmem:[#allocation7 + $0x240] sm:$0xff]
    %v195 = vld [vmem:[#allocation7 + $0x248] sm:$0xff]
    %v196 = vld [vmem:[#allocation7 + $0x250] sm:$0xff]
    %v197 = vld [vmem:[#allocation7 + $0x258] sm:$0xff]
    %v198 = vld [vmem:[#allocation7 + $0x260] sm:$0xff]
    %v199 = vld [vmem:[#allocation7 + $0x268] sm:$0xff]
    %v200 = vld [vmem:[#allocation7 + $0x270] sm:$0xff]
    %v201 = vld [vmem:[#allocation7 + $0x278] sm:$0xff]
    %v202 = vld [vmem:[#allocation7 + $0x280] sm:$0xff]
    %v203 = vld [vmem:[#allocation7 + $0x288] sm:$0xff]
    %v204 = vld [vmem:[#allocation7 + $0x290] sm:$0xff]
    %v205 = vld [vmem:[#allocation7 + $0x298] sm:$0xff]
    %v206 = vld [vmem:[#allocation7 + $0x2a0] sm:$0xff]
    %v207 = vld [vmem:[#allocation7 + $0x2a8] sm:$0xff]
    %v208 = vld [vmem:[#allocation7 + $0x2b0] sm:$0xff]
    %v209 = vld [vmem:[#allocation7 + $0x2b8] sm:$0xff]
    %v210 = vld [vmem:[#allocation7 + $0x2c0] sm:$0xff]
    %v211 = vld [vmem:[#allocation7 + $0x2c8] sm:$0xff]
    %v212 = vld [vmem:[#allocation7 + $0x2d0] sm:$0xff]
    %v213 = vld [vmem:[#allocation7 + $0x2d8] sm:$0xff]
    %v214 = vld [vmem:[#allocation7 + $0x2e0] sm:$0xff]
    %v215 = vld [vmem:[#allocation7 + $0x2e8] sm:$0xff]
    %v216 = vld [vmem:[#allocation7 + $0x2f0] sm:$0xff]
    %v217 = vld [vmem:[#allocation7 + $0x2f8] sm:$0xff]
    %v218 = vld [vmem:[#allocation7 + $0x300] sm:$0xff]
    %v219 = vld [vmem:[#allocation7 + $0x308] sm:$0xff]
    %v220 = vld [vmem:[#allocation7 + $0x310] sm:$0xff]
    %v221 = vld [vmem:[#allocation7 + $0x318] sm:$0xff]
    %v222 = vld [vmem:[#allocation7 + $0x320] sm:$0xff]
    %v223 = vld [vmem:[#allocation7 + $0x328] sm:$0xff]
    %v224 = vld [vmem:[#allocation7 + $0x330] sm:$0xff]
    %v225 = vld [vmem:[#allocation7 + $0x338] sm:$0xff]
    %v226 = vld [vmem:[#allocation7 + $0x340] sm:$0xff]
    %v227 = vld [vmem:[#allocation7 + $0x348] sm:$0xff]
    %v228 = vld [vmem:[#allocation7 + $0x350] sm:$0xff]
    %v229 = vld [vmem:[#allocation7 + $0x358] sm:$0xff]
    %v230 = vld [vmem:[#allocation7 + $0x360] sm:$0xff]
    %v231 = vld [vmem:[#allocation7 + $0x368] sm:$0xff]
    %v232 = vld [vmem:[#allocation7 + $0x370] sm:$0xff]
    %v233 = vld [vmem:[#allocation7 + $0x378] sm:$0xff]
    %v234 = vld [vmem:[#allocation7 + $0x380] sm:$0xff]
    %v235 = vld [vmem:[#allocation7 + $0x388] sm:$0xff]
    %v236 = vld [vmem:[#allocation7 + $0x390] sm:$0xff]
    %v237 = vld [vmem:[#allocation7 + $0x398] sm:$0xff]
    %v238 = vld [vmem:[#allocation7 + $0x3a0] sm:$0xff]
    %v239 = vld [vmem:[#allocation7 + $0x3a8] sm:$0xff]
    %v240 = vld [vmem:[#allocation7 + $0x3b0] sm:$0xff]
    %v241 = vld [vmem:[#allocation7 + $0x3b8] sm:$0xff]
    %v242 = vld [vmem:[#allocation7 + $0x3c0] sm:$0xff]
    %v243 = vld [vmem:[#allocation7 + $0x3c8] sm:$0xff]
    %v244 = vld [vmem:[#allocation7 + $0x3d0] sm:$0xff]
    %v245 = vld [vmem:[#allocation7 + $0x3d8] sm:$0xff]
    %v246 = vld [vmem:[#allocation7 + $0x3e0] sm:$0xff]
    %v247 = vld [vmem:[#allocation7 + $0x3e8] sm:$0xff]
    %v248 = vld [vmem:[#allocation7 + $0x3f0] sm:$0xff]
    %v249 = vld [vmem:[#allocation7 + $0x3f8] sm:$0xff]
    %v250 = vld [vmem:[#allocation7 + $0x400] sm:$0xff]
    %v251 = vld [vmem:[#allocation7 + $0x408] sm:$0xff]
    %v252 = vld [vmem:[#allocation7 + $0x410] sm:$0xff]
    %v253 = vld [vmem:[#allocation7 + $0x418] sm:$0xff]
    %v254 = vld [vmem:[#allocation7 + $0x420] sm:$0xff]
    %v255 = vld [vmem:[#allocation7 + $0x428] sm:$0xff]
    %v256 = vld [vmem:[#allocation7 + $0x430] sm:$0xff]
    %v257 = vld [vmem:[#allocation7 + $0x438] sm:$0xff]
    %v258 = vld [vmem:[#allocation7 + $0x440] sm:$0xff]
    %v259 = vld [vmem:[#allocation7 + $0x448] sm:$0xff]
    %v260 = vld [vmem:[#allocation7 + $0x450] sm:$0xff]
    %v261 = vld [vmem:[#allocation7 + $0x458] sm:$0xff]
    %v262 = vld [vmem:[#allocation7 + $0x460] sm:$0xff]
    %v263 = vld [vmem:[#allocation7 + $0x468] sm:$0xff]
    %v264 = vld [vmem:[#allocation7 + $0x470] sm:$0xff]
    %v265 = vld [vmem:[#allocation7 + $0x478] sm:$0xff]
    %v266 = vld [vmem:[#allocation7 + $0x480] sm:$0xff]
    %v267 = vld [vmem:[#allocation7 + $0x488] sm:$0xff]
    %v268 = vld [vmem:[#allocation7 + $0x490] sm:$0xff]
    %v269 = vld [vmem:[#allocation7 + $0x498] sm:$0xff]
    %v270 = vld [vmem:[#allocation7 + $0x4a0] sm:$0xff]
    %v271 = vld [vmem:[#allocation7 + $0x4a8] sm:$0xff]
    %v272 = vld [vmem:[#allocation7 + $0x4b0] sm:$0xff]
    %v273 = vld [vmem:[#allocation7 + $0x4b8] sm:$0xff]
    %v274 = vld [vmem:[#allocation7 + $0x4c0] sm:$0xff]
    %v275 = vld [vmem:[#allocation7 + $0x4c8] sm:$0xff]
    %v276 = vld [vmem:[#allocation7 + $0x4d0] sm:$0xff]
    %v277 = vld [vmem:[#allocation7 + $0x4d8] sm:$0xff]
    %v278 = vld [vmem:[#allocation7 + $0x4e0] sm:$0xff]
    %v279 = vld [vmem:[#allocation7 + $0x4e8] sm:$0xff]
    %v280 = vld [vmem:[#allocation7 + $0x4f0] sm:$0xff]
    %v281 = vld [vmem:[#allocation7 + $0x4f8] sm:$0xff]
    %v282 = vld [vmem:[#allocation7 + $0x500] sm:$0xff]
    %v283 = vld [vmem:[#allocation7 + $0x508] sm:$0xff]
    %v284 = vld [vmem:[#allocation7 + $0x510] sm:$0xff]
    %v285 = vld [vmem:[#allocation7 + $0x518] sm:$0xff]
    %v286 = vld [vmem:[#allocation7 + $0x520] sm:$0xff]
    %v287 = vld [vmem:[#allocation7 + $0x528] sm:$0xff]
    %v288 = vld [vmem:[#allocation7 + $0x530] sm:$0xff]
    %v289 = vld [vmem:[#allocation7 + $0x538] sm:$0xff]
    %v290 = vld [vmem:[#allocation7 + $0x540] sm:$0xff]
    %v291 = vld [vmem:[#allocation7 + $0x548] sm:$0xff]
    %v292 = vld [vmem:[#allocation7 + $0x550] sm:$0xff]
    %v293 = vld [vmem:[#allocation7 + $0x558] sm:$0xff]
    %v294 = vld [vmem:[#allocation7 + $0x560] sm:$0xff]
    %v295 = vld [vmem:[#allocation7 + $0x568] sm:$0xff]
    %v296 = vld [vmem:[#allocation7 + $0x570] sm:$0xff]
    %v297 = vld [vmem:[#allocation7 + $0x578] sm:$0xff]
    %v298 = vld [vmem:[#allocation7 + $0x580] sm:$0xff]
    %v299 = vld [vmem:[#allocation7 + $0x588] sm:$0xff]
    %v300 = vld [vmem:[#allocation7 + $0x590] sm:$0xff]
    %v301 = vld [vmem:[#allocation7 + $0x598] sm:$0xff]
    %v302 = vld [vmem:[#allocation7 + $0x5a0] sm:$0xff]
    %v303 = vld [vmem:[#allocation7 + $0x5a8] sm:$0xff]
    %v304 = vld [vmem:[#allocation7 + $0x5b0] sm:$0xff]
    %v305 = vld [vmem:[#allocation7 + $0x5b8] sm:$0xff]
    %v306 = vld [vmem:[#allocation7 + $0x5c0] sm:$0xff]
    %v307 = vld [vmem:[#allocation7 + $0x5c8] sm:$0xff]
    %v308 = vld [vmem:[#allocation7 + $0x5d0] sm:$0xff]
    %v309 = vld [vmem:[#allocation7 + $0x5d8] sm:$0xff]
    %v310 = vld [vmem:[#allocation7 + $0x5e0] sm:$0xff]
    %v311 = vld [vmem:[#allocation7 + $0x5e8] sm:$0xff]
    %v312 = vld [vmem:[#allocation7 + $0x5f0] sm:$0xff]
    %v313 = vld [vmem:[#allocation7 + $0x5f8] sm:$0xff]
    %v314 = vld [vmem:[#allocation7 + $0x600] sm:$0xff]
    %v315 = vld [vmem:[#allocation7 + $0x608] sm:$0xff]
    %v316 = vld [vmem:[#allocation7 + $0x610] sm:$0xff]
    %v317 = vld [vmem:[#allocation7 + $0x618] sm:$0xff]
    %v318 = vld [vmem:[%s3] sm:$0x3]
    %v320 = vlaneseq
    %v321 = vshrl.u32 %v320, 7
    %v322 = vsub.s32 0, %v321
    %v323 = vrot.slane %v318, %v322
    %v324 = vlaneseq
    %v325 = vshrl.u32 %v324, 7
    %v326 = vsub.s32 1, %v325
    %v327 = vrot.slane %v318, %v326
    %vm330 = vcmask 130048
    %v332 = vsel %vm330, %v121, 0
    %334 = vmatprep.subr.mxu0 %v123
    %335 = vmatpush1.msra.mxu0 %v122
    %336 = vmatprep.subr.mxu0 %v125
    %337 = vmatpush1.msra.mxu0 %v124
    %338 = vmatprep.subr.mxu0 %v127
    %339 = vmatpush1.msra.mxu0 %v126
    %340 = vmatprep.subr.mxu0 %v129
    %341 = vmatpush1.msra.mxu0 %v128
    %342 = vmatprep.subr.mxu0 %v131
    %343 = vmatpush1.msra.mxu0 %v130
    %344 = vmatprep.subr.mxu0 %v133
    %345 = vmatpush1.msra.mxu0 %v132
    %346 = vmatprep.subr.mxu0 %v135
    %347 = vmatpush1.msra.mxu0 %v134
    %348 = vmatprep.subr.mxu0 %v137
    %349 = vmatpush1.msra.mxu0 %v136
    %350 = vmatprep.subr.mxu0 %v139
    %351 = vmatpush1.msra.mxu0 %v138
    %352 = vmatprep.subr.mxu0 %v141
    %353 = vmatpush1.msra.mxu0 %v140
    %354 = vmatprep.subr.mxu0 %v143
    %355 = vmatpush1.msra.mxu0 %v142
    %356 = vmatprep.subr.mxu0 %v145
    %357 = vmatpush1.msra.mxu0 %v144
    %358 = vmatprep.subr.mxu0 %v147
    %359 = vmatpush1.msra.mxu0 %v146
    %360 = vmatprep.subr.mxu0 %v149
    %361 = vmatpush1.msra.mxu0 %v148
    %362 = vmatprep.subr.mxu0 %v151
    %363 = vmatpush1.msra.mxu0 %v150
    %364 = vmatprep.subr.mxu0 %v153
    %365 = vmatpush1.msra.mxu0 %v152
    %366 = vmatprep.subr.mxu0 %v155
    %367 = vmatpush1.msra.mxu0 %v154
    %368 = vmatprep.subr.mxu0 %v157
    %369 = vmatpush1.msra.mxu0 %v156
    %370 = vmatprep.subr.mxu0 %v159
    %371 = vmatpush1.msra.mxu0 %v158
    %372 = vmatprep.subr.mxu0 %v161
    %373 = vmatpush1.msra.mxu0 %v160
    %374 = vmatprep.subr.mxu0 %v163
    %375 = vmatpush1.msra.mxu0 %v162
    %376 = vmatprep.subr.mxu0 %v165
    %377 = vmatpush1.msra.mxu0 %v164
    %378 = vmatprep.subr.mxu0 %v167
    %379 = vmatpush1.msra.mxu0 %v166
    %380 = vmatprep.subr.mxu0 %v169
    %381 = vmatpush1.msra.mxu0 %v168
    %382 = vmatprep.subr.mxu0 %v171
    %383 = vmatpush1.msra.mxu0 %v170
    %384 = vmatprep.subr.mxu0 %v173
    %385 = vmatpush1.msra.mxu0 %v172
    %386 = vmatprep.subr.mxu0 %v175
    %387 = vmatpush1.msra.mxu0 %v174
    %388 = vmatprep.subr.mxu0 %v177
    %389 = vmatpush1.msra.mxu0 %v176
    %390 = vmatprep.subr.mxu0 %v179
    %391 = vmatpush1.msra.mxu0 %v178
    %392 = vmatprep.subr.mxu0 %v181
    %393 = vmatpush1.msra.mxu0 %v180
    %394 = vmatprep.subr.mxu0 %v183
    %395 = vmatpush1.msra.mxu0 %v182
    %396 = vmatprep.subr.mxu0 %v185
    %397 = vmatpush1.msra.mxu0 %v184
    %398 = vmatprep.mubr.f32.mxu0 %v116
    %399 = vmatmul.mubr.f32.gmra.mrb[0].mxu0 %v115
    %v400 = vpop.f32.mrb[0].mxu0
    %v401 = vadd.f32 %v323, %v400
    %v402 = vpop.f32.mrb[0].mxu0
    %v403 = vadd.f32 %v327, %v402
    %404 = vdwg.mxu0
    %405 = vmatprep.subr.mxu0 %v187
    %406 = vmatpush1.msra.mxu0 %v186
    %407 = vmatprep.subr.mxu0 %v189
    %408 = vmatpush1.msra.mxu0 %v188
    %409 = vmatprep.subr.mxu0 %v191
    %410 = vmatpush1.msra.mxu0 %v190
    %411 = vmatprep.subr.mxu0 %v193
    %412 = vmatpush1.msra.mxu0 %v192
    %413 = vmatprep.subr.mxu0 %v195
    %414 = vmatpush1.msra.mxu0 %v194
    %415 = vmatprep.subr.mxu0 %v197
    %416 = vmatpush1.msra.mxu0 %v196
    %417 = vmatprep.subr.mxu0 %v199
    %418 = vmatpush1.msra.mxu0 %v198
    %419 = vmatprep.subr.mxu0 %v201
    %420 = vmatpush1.msra.mxu0 %v200
    %421 = vmatprep.subr.mxu0 %v203
    %422 = vmatpush1.msra.mxu0 %v202
    %423 = vmatprep.subr.mxu0 %v205
    %424 = vmatpush1.msra.mxu0 %v204
    %425 = vmatprep.subr.mxu0 %v207
    %426 = vmatpush1.msra.mxu0 %v206
    %427 = vmatprep.subr.mxu0 %v209
    %428 = vmatpush1.msra.mxu0 %v208
    %429 = vmatprep.subr.mxu0 %v211
    %430 = vmatpush1.msra.mxu0 %v210
    %431 = vmatprep.subr.mxu0 %v213
    %432 = vmatpush1.msra.mxu0 %v212
    %433 = vmatprep.subr.mxu0 %v215
    %434 = vmatpush1.msra.mxu0 %v214
    %435 = vmatprep.subr.mxu0 %v217
    %436 = vmatpush1.msra.mxu0 %v216
    %437 = vmatprep.subr.mxu0 %v219
    %438 = vmatpush1.msra.mxu0 %v218
    %439 = vmatprep.subr.mxu0 %v221
    %440 = vmatpush1.msra.mxu0 %v220
    %441 = vmatprep.subr.mxu0 %v223
    %442 = vmatpush1.msra.mxu0 %v222
    %443 = vmatprep.subr.mxu0 %v225
    %444 = vmatpush1.msra.mxu0 %v224
    %445 = vmatprep.subr.mxu0 %v227
    %446 = vmatpush1.msra.mxu0 %v226
    %447 = vmatprep.subr.mxu0 %v229
    %448 = vmatpush1.msra.mxu0 %v228
    %449 = vmatprep.subr.mxu0 %v231
    %450 = vmatpush1.msra.mxu0 %v230
    %451 = vmatprep.subr.mxu0 %v233
    %452 = vmatpush1.msra.mxu0 %v232
    %453 = vmatprep.subr.mxu0 %v235
    %454 = vmatpush1.msra.mxu0 %v234
    %455 = vmatprep.subr.mxu0 %v237
    %456 = vmatpush1.msra.mxu0 %v236
    %457 = vmatprep.subr.mxu0 %v239
    %458 = vmatpush1.msra.mxu0 %v238
    %459 = vmatprep.subr.mxu0 %v241
    %460 = vmatpush1.msra.mxu0 %v240
    %461 = vmatprep.subr.mxu0 %v243
    %462 = vmatpush1.msra.mxu0 %v242
    %463 = vmatprep.subr.mxu0 %v245
    %464 = vmatpush1.msra.mxu0 %v244
    %465 = vmatprep.subr.mxu0 %v247
    %466 = vmatpush1.msra.mxu0 %v246
    %467 = vmatprep.subr.mxu0 %v249
    %468 = vmatpush1.msra.mxu0 %v248
    %469 = vmatprep.mubr.f32.mxu0 %v118
    %470 = vmatmul.mubr.f32.gmra.mrb[0].mxu0 %v117
    %v471 = vpop.f32.mrb[0].mxu0
    %v472 = vadd.f32 %v401, %v471
    %v473 = vpop.f32.mrb[0].mxu0
    %v474 = vadd.f32 %v403, %v473
    %475 = vdwg.mxu0
    %476 = vmatprep.subr.mxu0 %v251
    %477 = vmatpush1.msra.mxu0 %v250
    %478 = vmatprep.subr.mxu0 %v253
    %479 = vmatpush1.msra.mxu0 %v252
    %480 = vmatprep.subr.mxu0 %v255
    %481 = vmatpush1.msra.mxu0 %v254
    %482 = vmatprep.subr.mxu0 %v257
    %483 = vmatpush1.msra.mxu0 %v256
    %484 = vmatprep.subr.mxu0 %v259
    %485 = vmatpush1.msra.mxu0 %v258
    %486 = vmatprep.subr.mxu0 %v261
    %487 = vmatpush1.msra.mxu0 %v260
    %488 = vmatprep.subr.mxu0 %v263
    %489 = vmatpush1.msra.mxu0 %v262
    %490 = vmatprep.subr.mxu0 %v265
    %491 = vmatpush1.msra.mxu0 %v264
    %492 = vmatprep.subr.mxu0 %v267
    %493 = vmatpush1.msra.mxu0 %v266
    %494 = vmatprep.subr.mxu0 %v269
    %495 = vmatpush1.msra.mxu0 %v268
    %496 = vmatprep.subr.mxu0 %v271
    %497 = vmatpush1.msra.mxu0 %v270
    %498 = vmatprep.subr.mxu0 %v273
    %499 = vmatpush1.msra.mxu0 %v272
    %500 = vmatprep.subr.mxu0 %v275
    %501 = vmatpush1.msra.mxu0 %v274
    %502 = vmatprep.subr.mxu0 %v277
    %503 = vmatpush1.msra.mxu0 %v276
    %504 = vmatprep.subr.mxu0 %v279
    %505 = vmatpush1.msra.mxu0 %v278
    %506 = vmatprep.subr.mxu0 %v281
    %507 = vmatpush1.msra.mxu0 %v280
    %508 = vmatprep.subr.mxu0 %v283
    %509 = vmatpush1.msra.mxu0 %v282
    %510 = vmatprep.subr.mxu0 %v285
    %511 = vmatpush1.msra.mxu0 %v284
    %512 = vmatprep.subr.mxu0 %v287
    %513 = vmatpush1.msra.mxu0 %v286
    %514 = vmatprep.subr.mxu0 %v289
    %515 = vmatpush1.msra.mxu0 %v288
    %516 = vmatprep.subr.mxu0 %v291
    %517 = vmatpush1.msra.mxu0 %v290
    %518 = vmatprep.subr.mxu0 %v293
    %519 = vmatpush1.msra.mxu0 %v292
    %520 = vmatprep.subr.mxu0 %v295
    %521 = vmatpush1.msra.mxu0 %v294
    %522 = vmatprep.subr.mxu0 %v297
    %523 = vmatpush1.msra.mxu0 %v296
    %524 = vmatprep.subr.mxu0 %v299
    %525 = vmatpush1.msra.mxu0 %v298
    %526 = vmatprep.subr.mxu0 %v301
    %527 = vmatpush1.msra.mxu0 %v300
    %528 = vmatprep.subr.mxu0 %v303
    %529 = vmatpush1.msra.mxu0 %v302
    %530 = vmatprep.subr.mxu0 %v305
    %531 = vmatpush1.msra.mxu0 %v304
    %532 = vmatprep.subr.mxu0 %v307
    %533 = vmatpush1.msra.mxu0 %v306
    %534 = vmatprep.subr.mxu0 %v309
    %535 = vmatpush1.msra.mxu0 %v308
    %536 = vmatprep.subr.mxu0 %v311
    %537 = vmatpush1.msra.mxu0 %v310
    %538 = vmatprep.subr.mxu0 %v313
    %539 = vmatpush1.msra.mxu0 %v312
    %540 = vmatprep.mubr.f32.mxu0 %v120
    %541 = vmatmul.mubr.f32.gmra.mrb[0].mxu0 %v119
    %v542 = vpop.f32.mrb[0].mxu0
    %v543 = vadd.f32 %v472, %v542
    %v544 = vpop.f32.mrb[0].mxu0
    %v545 = vadd.f32 %v474, %v544
    %546 = vdwg.mxu0
    %547 = vmatprep.subr.mxu0 %v315
    %548 = vmatpush1.msra.mxu0 %v314
    %549 = vmatprep.subr.mxu0 %v317
    %550 = vmatpush1.msra.mxu0 %v316
    %551 = vmatprep.subr.mxu0 0.0
    %552 = vmatpush1.msra.mxu0 0.0
    %553 = vmatprep.subr.mxu0 0.0
    %554 = vmatpush1.msra.mxu0 0.0
    %555 = vmatprep.subr.mxu0 0.0
    %556 = vmatpush1.msra.mxu0 0.0
    %557 = vmatprep.subr.mxu0 0.0
    %558 = vmatpush1.msra.mxu0 0.0
    %559 = vmatprep.subr.mxu0 0.0
    %560 = vmatpush1.msra.mxu0 0.0
    %561 = vmatprep.subr.mxu0 0.0
    %562 = vmatpush1.msra.mxu0 0.0
    %563 = vmatprep.subr.mxu0 0.0
    %564 = vmatpush1.msra.mxu0 0.0
    %565 = vmatprep.subr.mxu0 0.0
    %566 = vmatpush1.msra.mxu0 0.0
    %567 = vmatprep.subr.mxu0 0.0
    %568 = vmatpush1.msra.mxu0 0.0
    %569 = vmatprep.subr.mxu0 0.0
    %570 = vmatpush1.msra.mxu0 0.0
    %571 = vmatprep.subr.mxu0 0.0
    %572 = vmatpush1.msra.mxu0 0.0
    %573 = vmatprep.subr.mxu0 0.0
    %574 = vmatpush1.msra.mxu0 0.0
    %575 = vmatprep.subr.mxu0 0.0
    %576 = vmatpush1.msra.mxu0 0.0
    %577 = vmatprep.subr.mxu0 0.0
    %578 = vmatpush1.msra.mxu0 0.0
    %579 = vmatprep.subr.mxu0 0.0
    %580 = vmatpush1.msra.mxu0 0.0
    %581 = vmatprep.subr.mxu0 0.0
    %582 = vmatpush1.msra.mxu0 0.0
    %583 = vmatprep.subr.mxu0 0.0
    %584 = vmatpush1.msra.mxu0 0.0
    %585 = vmatprep.subr.mxu0 0.0
    %586 = vmatpush1.msra.mxu0 0.0
    %587 = vmatprep.subr.mxu0 0.0
    %588 = vmatpush1.msra.mxu0 0.0
    %589 = vmatprep.subr.mxu0 0.0
    %590 = vmatpush1.msra.mxu0 0.0
    %591 = vmatprep.subr.mxu0 0.0
    %592 = vmatpush1.msra.mxu0 0.0
    %593 = vmatprep.subr.mxu0 0.0
    %594 = vmatpush1.msra.mxu0 0.0
    %595 = vmatprep.subr.mxu0 0.0
    %596 = vmatpush1.msra.mxu0 0.0
    %597 = vmatprep.subr.mxu0 0.0
    %598 = vmatpush1.msra.mxu0 0.0
    %599 = vmatprep.subr.mxu0 0.0
    %600 = vmatpush1.msra.mxu0 0.0
    %601 = vmatprep.subr.mxu0 0.0
    %602 = vmatpush1.msra.mxu0 0.0
    %603 = vmatprep.subr.mxu0 0.0
    %604 = vmatpush1.msra.mxu0 0.0
    %605 = vmatprep.subr.mxu0 0.0
    %606 = vmatpush1.msra.mxu0 0.0
    %607 = vmatprep.subr.mxu0 0.0
    %608 = vmatpush1.msra.mxu0 0.0
    %609 = vmatprep.subr.mxu0 0.0
    %610 = vmatpush1.msra.mxu0 0.0
    %611 = vmatprep.mubr.f32.mxu0 0.0
    %612 = vmatmul.mubr.f32.gmra.mrb[0].mxu0 %v332
    %v613 = vpop.f32.mrb[0].mxu0
    %v614 = vadd.f32 %v543, %v613
    %v615 = vpop.f32.mrb[0].mxu0
    %v616 = vadd.f32 %v545, %v615
    %617 = vdwg.mxu0
    %v618 = vmax.f32 %v614, 0.0
    %v619 = vmax.f32 %v616, 0.0
    %v620 = vld [vmem:[#allocation8] sm:$0xff]
    %v621 = vld [vmem:[#allocation8 + $0x8] sm:$0xff]
    %v622 = vld [vmem:[#allocation8 + $0x10] sm:$0xff]
    %v623 = vld [vmem:[#allocation8 + $0x18] sm:$0xff]
    %v624 = vld [vmem:[#allocation8 + $0x20] sm:$0xff]
    %v625 = vld [vmem:[#allocation8 + $0x28] sm:$0xff]
    %v626 = vld [vmem:[#allocation8 + $0x30] sm:$0xff]
    %v627 = vld [vmem:[#allocation8 + $0x38] sm:$0xff]
    %v628 = vld [vmem:[#allocation8 + $0x40] sm:$0xff]
    %v629 = vld [vmem:[#allocation8 + $0x48] sm:$0xff]
    %v630 = vld [vmem:[#allocation8 + $0x50] sm:$0xff]
    %v631 = vld [vmem:[#allocation8 + $0x58] sm:$0xff]
    %v632 = vld [vmem:[#allocation8 + $0x60] sm:$0xff]
    %v633 = vld [vmem:[#allocation8 + $0x68] sm:$0xff]
    %v634 = vld [vmem:[#allocation8 + $0x70] sm:$0xff]
    %v635 = vld [vmem:[#allocation8 + $0x78] sm:$0xff]
    %v636 = vld [vmem:[#allocation8 + $0x80] sm:$0xff]
    %v637 = vld [vmem:[#allocation8 + $0x88] sm:$0xff]
    %v638 = vld [vmem:[#allocation8 + $0x90] sm:$0xff]
    %v639 = vld [vmem:[#allocation8 + $0x98] sm:$0xff]
    %v640 = vld [vmem:[#allocation8 + $0xa0] sm:$0xff]
    %v641 = vld [vmem:[#allocation8 + $0xa8] sm:$0xff]
    %v642 = vld [vmem:[#allocation8 + $0xb0] sm:$0xff]
    %v643 = vld [vmem:[#allocation8 + $0xb8] sm:$0xff]
    %v644 = vld [vmem:[#allocation8 + $0xc0] sm:$0xff]
    %v645 = vld [vmem:[#allocation8 + $0xc8] sm:$0xff]
    %v646 = vld [vmem:[#allocation8 + $0xd0] sm:$0xff]
    %v647 = vld [vmem:[#allocation8 + $0xd8] sm:$0xff]
    %v648 = vld [vmem:[#allocation8 + $0xe0] sm:$0xff]
    %v649 = vld [vmem:[#allocation8 + $0xe8] sm:$0xff]
    %v650 = vld [vmem:[#allocation8 + $0xf0] sm:$0xff]
    %v651 = vld [vmem:[#allocation8 + $0xf8] sm:$0xff]
    %v652 = vld [vmem:[%s5] sm:$0x1]
    %v654 = vlaneseq
    %v655 = vshrl.u32 %v654, 7
    %v656 = vsub.s32 0, %v655
    %v657 = vrot.slane %v652, %v656
    %659 = vmatprep.subr.mxu0 0.0
    %660 = vmatpush1.msra.mxu0 %v620
    %661 = vmatprep.subr.mxu0 0.0
    %662 = vmatpush1.msra.mxu0 %v621
    %663 = vmatprep.subr.mxu0 0.0
    %664 = vmatpush1.msra.mxu0 %v622
    %665 = vmatprep.subr.mxu0 0.0
    %666 = vmatpush1.msra.mxu0 %v623
    %667 = vmatprep.subr.mxu0 0.0
    %668 = vmatpush1.msra.mxu0 %v624
    %669 = vmatprep.subr.mxu0 0.0
    %670 = vmatpush1.msra.mxu0 %v625
    %671 = vmatprep.subr.mxu0 0.0
    %672 = vmatpush1.msra.mxu0 %v626
    %673 = vmatprep.subr.mxu0 0.0
    %674 = vmatpush1.msra.mxu0 %v627
    %675 = vmatprep.subr.mxu0 0.0
    %676 = vmatpush1.msra.mxu0 %v628
    %677 = vmatprep.subr.mxu0 0.0
    %678 = vmatpush1.msra.mxu0 %v629
    %679 = vmatprep.subr.mxu0 0.0
    %680 = vmatpush1.msra.mxu0 %v630
    %681 = vmatprep.subr.mxu0 0.0
    %682 = vmatpush1.msra.mxu0 %v631
    %683 = vmatprep.subr.mxu0 0.0
    %684 = vmatpush1.msra.mxu0 %v632
    %685 = vmatprep.subr.mxu0 0.0
    %686 = vmatpush1.msra.mxu0 %v633
    %687 = vmatprep.subr.mxu0 0.0
    %688 = vmatpush1.msra.mxu0 %v634
    %689 = vmatprep.subr.mxu0 0.0
    %690 = vmatpush1.msra.mxu0 %v635
    %691 = vmatprep.subr.mxu0 0.0
    %692 = vmatpush1.msra.mxu0 %v636
    %693 = vmatprep.subr.mxu0 0.0
    %694 = vmatpush1.msra.mxu0 %v637
    %695 = vmatprep.subr.mxu0 0.0
    %696 = vmatpush1.msra.mxu0 %v638
    %697 = vmatprep.subr.mxu0 0.0
    %698 = vmatpush1.msra.mxu0 %v639
    %699 = vmatprep.subr.mxu0 0.0
    %700 = vmatpush1.msra.mxu0 %v640
    %701 = vmatprep.subr.mxu0 0.0
    %702 = vmatpush1.msra.mxu0 %v641
    %703 = vmatprep.subr.mxu0 0.0
    %704 = vmatpush1.msra.mxu0 %v642
    %705 = vmatprep.subr.mxu0 0.0
    %706 = vmatpush1.msra.mxu0 %v643
    %707 = vmatprep.subr.mxu0 0.0
    %708 = vmatpush1.msra.mxu0 %v644
    %709 = vmatprep.subr.mxu0 0.0
    %710 = vmatpush1.msra.mxu0 %v645
    %711 = vmatprep.subr.mxu0 0.0
    %712 = vmatpush1.msra.mxu0 %v646
    %713 = vmatprep.subr.mxu0 0.0
    %714 = vmatpush1.msra.mxu0 %v647
    %715 = vmatprep.subr.mxu0 0.0
    %716 = vmatpush1.msra.mxu0 %v648
    %717 = vmatprep.subr.mxu0 0.0
    %718 = vmatpush1.msra.mxu0 %v649
    %719 = vmatprep.subr.mxu0 0.0
    %720 = vmatpush1.msra.mxu0 %v650
    %721 = vmatprep.subr.mxu0 0.0
    %722 = vmatpush1.msra.mxu0 %v651
    %723 = vmatprep.mubr.f32.mxu0 %v619
    %724 = vmatmul.mubr.f32.gmra.mrb[0].mxu0 %v618
    %v725 = vpop.f32.mrb[0].mxu0
    %v726 = vadd.f32 %v657, %v725
    %v727 = vpop.f32.mrb[0].mxu0
    %728 = vdwg.mxu0
    %v729 = vmax.f32 %v726, 0.0
    %v730 = vld [vmem:[#allocation10] sm:$0xff]
    %v731 = vld [vmem:[#allocation10 + $0x8] sm:$0xff]
    %v732 = vld [vmem:[#allocation10 + $0x10] sm:$0xff]
    %v733 = vld [vmem:[#allocation10 + $0x18] sm:$0xff]
    %v734 = vld [vmem:[#allocation10 + $0x20] sm:$0xff]
    %v735 = vld [vmem:[#allocation10 + $0x28] sm:$0xff]
    %v736 = vld [vmem:[#allocation10 + $0x30] sm:$0xff]
    %v737 = vld [vmem:[#allocation10 + $0x38] sm:$0xff]
    %v738 = vld [vmem:[#allocation10 + $0x40] sm:$0xff]
    %v739 = vld [vmem:[#allocation10 + $0x48] sm:$0xff]
    %v740 = vld [vmem:[#allocation10 + $0x50] sm:$0xff]
    %v741 = vld [vmem:[#allocation10 + $0x58] sm:$0xff]
    %v742 = vld [vmem:[#allocation10 + $0x60] sm:$0xff]
    %v743 = vld [vmem:[#allocation10 + $0x68] sm:$0xff]
    %v744 = vld [vmem:[#allocation10 + $0x70] sm:$0xff]
    %v745 = vld [vmem:[#allocation10 + $0x78] sm:$0xff]
    %v746 = vld [vmem:[%s7] sm:$0x1]
    %v748 = vlaneseq
    %v749 = vshrl.u32 %v748, 7
    %v750 = vsub.s32 0, %v749
    %v751 = vrot.slane %v746, %v750
    %753 = vmatprep.subr.mxu0 0.0
    %754 = vmatpush1.msra.mxu0 %v730
    %755 = vmatprep.subr.mxu0 0.0
    %756 = vmatpush1.msra.mxu0 %v731
    %757 = vmatprep.subr.mxu0 0.0
    %758 = vmatpush1.msra.mxu0 %v732
    %759 = vmatprep.subr.mxu0 0.0
    %760 = vmatpush1.msra.mxu0 %v733
    %761 = vmatprep.subr.mxu0 0.0
    %762 = vmatpush1.msra.mxu0 %v734
    %763 = vmatprep.subr.mxu0 0.0
    %764 = vmatpush1.msra.mxu0 %v735
    %765 = vmatprep.subr.mxu0 0.0
    %766 = vmatpush1.msra.mxu0 %v736
    %767 = vmatprep.subr.mxu0 0.0
    %768 = vmatpush1.msra.mxu0 %v737
    %769 = vmatprep.subr.mxu0 0.0
    %770 = vmatpush1.msra.mxu0 %v738
    %771 = vmatprep.subr.mxu0 0.0
    %772 = vmatpush1.msra.mxu0 %v739
    %773 = vmatprep.subr.mxu0 0.0
    %774 = vmatpush1.msra.mxu0 %v740
    %775 = vmatprep.subr.mxu0 0.0
    %776 = vmatpush1.msra.mxu0 %v741
    %777 = vmatprep.subr.mxu0 0.0
    %778 = vmatpush1.msra.mxu0 %v742
    %779 = vmatprep.subr.mxu0 0.0
    %780 = vmatpush1.msra.mxu0 %v743
    %781 = vmatprep.subr.mxu0 0.0
    %782 = vmatpush1.msra.mxu0 %v744
    %783 = vmatprep.subr.mxu0 0.0
    %784 = vmatpush1.msra.mxu0 %v745
    %785 = vmatprep.subr.mxu0 0.0
    %786 = vmatpush1.msra.mxu0 0.0
    %787 = vmatprep.subr.mxu0 0.0
    %788 = vmatpush1.msra.mxu0 0.0
    %789 = vmatprep.subr.mxu0 0.0
    %790 = vmatpush1.msra.mxu0 0.0
    %791 = vmatprep.subr.mxu0 0.0
    %792 = vmatpush1.msra.mxu0 0.0
    %793 = vmatprep.subr.mxu0 0.0
    %794 = vmatpush1.msra.mxu0 0.0
    %795 = vmatprep.subr.mxu0 0.0
    %796 = vmatpush1.msra.mxu0 0.0
    %797 = vmatprep.subr.mxu0 0.0
    %798 = vmatpush1.msra.mxu0 0.0
    %799 = vmatprep.subr.mxu0 0.0
    %800 = vmatpush1.msra.mxu0 0.0
    %801 = vmatprep.subr.mxu0 0.0
    %802 = vmatpush1.msra.mxu0 0.0
    %803 = vmatprep.subr.mxu0 0.0
    %804 = vmatpush1.msra.mxu0 0.0
    %805 = vmatprep.subr.mxu0 0.0
    %806 = vmatpush1.msra.mxu0 0.0
    %807 = vmatprep.subr.mxu0 0.0
    %808 = vmatpush1.msra.mxu0 0.0
    %809 = vmatprep.subr.mxu0 0.0
    %810 = vmatpush1.msra.mxu0 0.0
    %811 = vmatprep.subr.mxu0 0.0
    %812 = vmatpush1.msra.mxu0 0.0
    %813 = vmatprep.subr.mxu0 0.0
    %814 = vmatpush1.msra.mxu0 0.0
    %815 = vmatprep.subr.mxu0 0.0
    %816 = vmatpush1.msra.mxu0 0.0
    %817 = vmatprep.mubr.f32.mxu0 0.0
    %818 = vmatmul.mubr.f32.gmra.mrb[0].mxu0 %v729
    %v819 = vpop.f32.mrb[0].mxu0
    %v820 = vadd.f32 %v751, %v819
    %v821 = vpop.f32.mrb[0].mxu0
    %822 = vdwg.mxu0
    %v823 = vlaneseq
    %v824 = vand.u32 %v823, 127
    %vm825 = vcmp.ge.s32.totalorder %v824, 32
    %v826 = vmul.f32 %v820, 1.442695
    %v827 = vpow.pop %v826
    %v828 = vsel %vm825, %v827, %v820
    %829 = vst [vmem:[#allocation11] sm:$0xff] %v828
    // Predicated region
    $region54: #{tpu_custom_call.1} parent=1 // pred_check
      _
    $region55: #{tpu_custom_call.1} parent=1 // pred_check_branch
      %831 = sbr.rel (0) target = $region57
    $region56: #{tpu_custom_call.1} parent=1 // pred_region
      %s833 = ssub.s32 128, 128
      %834 = vsyncadd [#allocation4], %s833
      %s836 = sshll.u32 [#allocation11], 4
      %s837 = int_to_ptr.vmem [resolvable:$true] %s836
      %839 = dma.vmem_to_hbm [thread:$0]  %s837, 128, %s8, [#allocation4]
    $region57: #{tpu_custom_call.1} parent=1 // pred_fallthru
      _
    // Predicated region
    $region58: #{tpu_custom_call.1} parent=1 // pred_check
      _
    $region59: #{tpu_custom_call.1} parent=1 // pred_check_branch
      %841 = sbr.rel (0) target = $region61
    $region60: #{tpu_custom_call.1} parent=1 // pred_region
      %842 = dma.done [#allocation4], 128
    $region61: #{tpu_custom_call.1} parent=1 // pred_fallthru
      _
    %843 = vsyncpa [#allocation3], 1
    %844 = vsyncpa [#allocation6], 1
    %845 = vsyncpa [#allocation9], 1
    %846 = vsyncpa [#allocation4], 1

</llo_original>
